<compile_context>
chip_gen: v6e
topology: v6e:2x2x1
jax: 0.10.0
libtpu: 0.0.40
codegen_flags: <defaults>
</compile_context>

<pallas_src>
import jax
import jax.numpy as jnp
from jax.experimental import pallas as pl
from jax.experimental.pallas import tpu as pltpu

_LANE_CHOICES = (2048, 1024, 512, 256, 128)
_SMALL_BYTES = 256 * 1024      # below this, fused XLA elementwise wins
_SLACK_BYTES = 16 << 20        # scoped-VMEM headroom on top of the buffers


def _absdiff_kernel(x1_ref, x2_ref, o_ref):
    # Pure VPU work on the whole VMEM tile.
    o_ref[...] = jnp.abs(x1_ref[...] - x2_ref[...]).astype(o_ref.dtype)


def _round_up(x, m):
    return ((x + m - 1) // m) * m


def _vmem_capacity_bytes():
    """Per-TensorCore VMEM for the current generation (conservative default)."""
    try:
        kind = jax.devices()[0].device_kind.lower()
    except Exception:
        return 64 << 20
    if "v5" in kind or "v6" in kind:
        return 128 << 20       # v5e / v6e: 128 MiB per TensorCore
    return 64 << 20            # v7x (and unknown): 64 MiB per TensorCore


def dt_forward(x1, x2):
    """Pallas implementation of DT.forward: dt = |x1 - x2| (elementwise)."""
    assert x1.shape == x2.shape, "x1 and x2 must have identical shapes"
    orig_shape = x1.shape
    out_dtype = jnp.result_type(x1.dtype, x2.dtype)
    itemsize = jnp.dtype(out_dtype).itemsize

    total = 1
    for d in orig_shape:
        total *= int(d)

    # Small-input bypass: pallas_call fixed cost + wrapper reshapes dwarf the
    # compute at these sizes; XLA's fused elementwise is strictly better.
    if total == 0 or total * itemsize <= _SMALL_BYTES:
        return jnp.abs(x1.astype(out_dtype) - x2.astype(out_dtype))

    # Pick the widest lane-dense last dim that divides total (free reshape).
    lane = None
    for cand in _LANE_CHOICES:
        if total % cand == 0:
            lane = cand
            break

    x1_flat = x1.reshape(total).astype(out_dtype)
    x2_flat = x2.reshape(total).astype(out_dtype)

    if lane is None:
        # Rare fallback (total not a multiple of 128): pad only to the lane
        # multiple (< 128 extra elements), never to a full tile multiple.
        lane = 128
        rows = pl.cdiv(total, lane)
        pad = rows * lane - total
        x1_flat = jnp.pad(x1_flat, (0, pad))
        x2_flat = jnp.pad(x2_flat, (0, pad))
        padded_total = rows * lane
    else:
        rows = total // lane
        padded_total = total

    x1_2d = x1_flat.reshape(rows, lane)
    x2_2d = x2_flat.reshape(rows, lane)

    # Generation-aware tile: 8 MiB/operand on v5e/v6e, 4 MiB/operand on v7x.
    vmem_cap = _vmem_capacity_bytes()
    tile_bytes_max = (8 << 20) if vmem_cap >= (128 << 20) else (4 << 20)
    tile_rows_max = max(8, (tile_bytes_max // (lane * itemsize)) // 8 * 8)

    # Keep the parallel grid axis >= 2 blocks so v7x megacore doesn't idle a
    # TensorCore on mid-size inputs.  tile_rows stays a multiple of 8.
    half_rows = _round_up(pl.cdiv(rows, 2), 8)
    tile_rows = max(8, min(tile_rows_max, half_rows))

    grid = (pl.cdiv(rows, tile_rows),)
    block = (tile_rows, lane)
    tile_bytes = tile_rows * lane * itemsize
    vmem_limit = int(min(6 * tile_bytes + _SLACK_BYTES, vmem_cap))

    out_2d = pl.pallas_call(
        _absdiff_kernel,
        out_shape=jax.ShapeDtypeStruct((rows, lane), out_dtype),
        grid=grid,
        in_specs=[
            pl.BlockSpec(block, lambda i: (i, 0)),
            pl.BlockSpec(block, lambda i: (i, 0)),
        ],
        out_specs=pl.BlockSpec(block, lambda i: (i, 0)),
        compiler_params=pltpu.CompilerParams(
            # Embarrassingly parallel -> megacore sharding on v7x.
            dimension_semantics=("parallel",),
            vmem_limit_bytes=vmem_limit,
        ),
    )(x1_2d, x2_2d)

    out_flat = out_2d.reshape(rows * lane)
    if padded_total != total:
        out_flat = out_flat[:total]
    return out_flat.reshape(orig_shape)


if __name__ == "__main__":
    key = jax.random.PRNGKey(0)
    k1, k2, k3, k4 = jax.random.split(key, 4)

    # Small module-consistent shape (NCHW) — takes the fused-XLA bypass path.
    x1_small = jax.random.normal(k1, (2, 4, 16, 16), dtype=jnp.float32)
    x2_small = jax.random.normal(k2, (2, 4, 16, 16), dtype=jnp.float32)
    out_small = dt_forward(x1_small, x2_small)
    jax.block_until_ready(out_small)
    ref_small = jnp.abs(x1_small - x2_small)
    assert out_small.shape == ref_small.shape and out_small.dtype == ref_small.dtype
    assert jnp.allclose(out_small, ref_small), "small-input mismatch vs reference"

    # Larger shape (512 KiB per input) — exercises the Pallas kernel path.
    x1_big = jax.random.normal(k3, (2, 4, 128, 128), dtype=jnp.float32)
    x2_big = jax.random.normal(k4, (2, 4, 128, 128), dtype=jnp.float32)
    out_big = dt_forward(x1_big, x2_big)
    jax.block_until_ready(out_big)
    ref_big = jnp.abs(x1_big - x2_big)
    assert out_big.shape == ref_big.shape and out_big.dtype == ref_big.dtype
    assert jnp.allclose(out_big, ref_big), "large-input mismatch vs reference"

    print("KERNEL_OK")
</pallas_src>

<mosaic_0001>
module attributes {stable_mosaic.version = 11 : i64} {
  func.func @_absdiff_kernel(%arg0: i32, %arg1: memref<32x2048xf32, #tpu.memory_space<vmem>>, %arg2: memref<32x2048xf32, #tpu.memory_space<vmem>>, %arg3: memref<32x2048xf32, #tpu.memory_space<vmem>>) attributes {dimension_semantics = [#tpu.dimension_semantics<parallel>], iteration_bounds = array<i64: 2>, scalar_prefetch = 0 : i64, scratch_operands = 0 : i64, tpu.core_type = #tpu.core_type<tc>, window_params = [{transform_indices = @transform_0, window_bounds = array<i64: 32, 2048>}, {transform_indices = @transform_1, window_bounds = array<i64: 32, 2048>}, {transform_indices = @transform_2, window_bounds = array<i64: 32, 2048>}]} {
    %c0 = arith.constant 0 : index
    %c0_0 = arith.constant 0 : index
    %0 = vector.load %arg1[%c0, %c0_0] : memref<32x2048xf32, #tpu.memory_space<vmem>>, vector<32x2048xf32>
    %c0_1 = arith.constant 0 : index
    %c0_2 = arith.constant 0 : index
    %1 = vector.load %arg2[%c0_1, %c0_2] : memref<32x2048xf32, #tpu.memory_space<vmem>>, vector<32x2048xf32>
    %2 = arith.subf %0, %1 : vector<32x2048xf32>
    %3 = math.absf %2 : vector<32x2048xf32>
    %c0_3 = arith.constant 0 : index
    %c0_4 = arith.constant 0 : index
    %4 = vector.load %arg3[%c0_3, %c0_4] : memref<32x2048xf32, #tpu.memory_space<vmem>>, vector<32x2048xf32>
    tpu.vector_store %arg3[%c0_3, %c0_4], %3 {strides = array<i32>} : memref<32x2048xf32, #tpu.memory_space<vmem>>, vector<32x2048xf32>,
    return
  }
  func.func @transform_0(%arg0: i32) -> (i32, i32) {
    %c0_i32 = arith.constant 0 : i32
    %c0_i32_0 = arith.constant 0 : i32
    return %arg0, %c0_i32 : i32, i32
  }
  func.func @transform_1(%arg0: i32) -> (i32, i32) {
    %c0_i32 = arith.constant 0 : i32
    %c0_i32_0 = arith.constant 0 : i32
    return %arg0, %c0_i32 : i32, i32
  }
  func.func @transform_2(%arg0: i32) -> (i32, i32) {
    %c0_i32 = arith.constant 0 : i32
    %c0_i32_0 = arith.constant 0 : i32
    return %arg0, %c0_i32 : i32, i32
  }
}

</mosaic_0001>

<llo_original>
// kernel: tpu_custom_call.1
$region0: #{tpu_custom_call.1}
  #allocation0 [shape = 'u32[]', space=smem, size = 0x4, offset = 0x4, fixed_abs, tag = 'smem constant byte address 0x4 - core index']
  #allocation1 [shape = 'u32[144,128]{1,0:T(1,128)}', space=vmem, size = 0x12000, scoped, tag = 'internal scratch']
  %s0 = inlined_call_operand.hbm [shape: f32[64,2048], index: 0, kind: input, shape index: {}]
  %s1 = inlined_call_operand.hbm [shape: f32[64,2048], index: 1, kind: input, shape index: {}]
  %s2 = inlined_call_operand.hbm [shape: f32[64,2048], index: 2, kind: output, shape index: {}]
  %s3 = sld [smem:[#allocation0]]
  $region49: #{tpu_custom_call.1} parent=0
    _
  %s5 = ssub.s32 1, %s3
  %s6 = scalar_select 0, %s5, %s3
  $region1: #{tpu_custom_call.1} parent=0
    #allocation2 [shape = 'u8[524288]{0}', space=vmem, size = 0x80000, scoped, tag = 'input window, operand 0']
    #allocation3 [shape = 's32[2]{0}', space=sflag, size = 0x8, scoped, tag = 'scoped memory for tpu_custom_call.1']
    #allocation4 [shape = 's32[2]{0}', space=sflag, size = 0x8, scoped, tag = 'scoped memory for tpu_custom_call.1']
    #allocation5 [shape = 'u8[524288]{0}', space=vmem, size = 0x80000, scoped, tag = 'input window, operand 1']
    #allocation6 [shape = 's32[2]{0}', space=sflag, size = 0x8, scoped, tag = 'scoped memory for tpu_custom_call.1']
    #allocation7 [shape = 'u8[524288]{0}', space=vmem, size = 0x80000, scoped, tag = 'output window, operand 0']
    %7 = vsyncpa [#allocation3], 0
    %s8 = scalar_lea.sflag [#allocation3], 1
    %9 = vsyncpa %s8, 0
    %10 = vsyncpa [#allocation6], 0
    %s11 = scalar_lea.sflag [#allocation6], 1
    %12 = vsyncpa %s11, 0
    %13 = vsyncpa [#allocation4], 0
    %s14 = scalar_lea.sflag [#allocation4], 1
    %15 = vsyncpa %s14, 0
    loop: start=0, step=1, limit=4
    $region2: #{tpu_custom_call.1} parent=1 // loop_pre_header
      _
    $region3: #{tpu_custom_call.1} parent=1 // loop_header
      %s17 = sphi 0, %s21
      %p18 = scmp.ge.s32.totalorder %s17, 4
      %s27 = sphi 0, %s29
      %s30 = sphi 0, %s27
      %s31 = sphi 0, %s30
      %s47 = sphi 0, %s31
      %s53 = sphi 0, %s55
      %s56 = sphi 0, %s53
      %s57 = sphi 0, %s56
      %s73 = sphi 0, %s57
      %s79 = sphi 0, %s81
      %s82 = sphi 0, %s79
      %s83 = sphi 0, %s82
      %s99 = sphi 0, %s83
    $region4: #{tpu_custom_call.1} parent=1 // loop_header_branch
      %20 = sbr.rel (%p18) target = $region8
    $region5: #{tpu_custom_call.1} parent=1 // loop_body
      %s22 = ssub.s32 %s17, 1
      %s23 = ssub.s32 %s17, 2
      %s24 = sadd.s32 %s17, 1
      %s25 = ssub.s32 %s17, %s24
      %p26 = scmp.eq.s32.totalorder %s25, 0
      %s28 = sadd.s32 %s27, 1
      %s29 = scalar_select %p26, %s27, %s28
      %p32 = pneg %p26
      %p33 = scmp.eq.s32.totalorder %s17, 1
      %p34 = por %p32, %p33
      %p35 = scmp.ne.s32.totalorder %s27, %s30
      %p36 = scmp.eq.s32.totalorder %s17, 0
      %p37 = por %p35, %p36
      %p38 = scmp.ne.s32.totalorder %s27, %s30
      %p39 = scmp.eq.s32.totalorder %s22, 1
      %p40 = por %p38, %p39
      %p41 = scmp.ne.s32.totalorder %s30, %s31
      %p42 = scmp.eq.s32.totalorder %s22, 0
      %p43 = por %p41, %p42
      %p44 = scmp.ne.s32.totalorder %s30, %s31
      %p45 = scmp.eq.s32.totalorder %s23, 1
      %p46 = por %p44, %p45
      %p48 = scmp.ne.s32.totalorder %s31, %s47
      %p49 = scmp.eq.s32.totalorder %s23, 0
      %p50 = por %p48, %p49
      %s51 = ssub.s32 %s17, %s24
      %p52 = scmp.eq.s32.totalorder %s51, 0
      %s54 = sadd.s32 %s53, 1
      %s55 = scalar_select %p52, %s53, %s54
      %p58 = pneg %p52
      %p59 = scmp.eq.s32.totalorder %s17, 1
      %p60 = por %p58, %p59
      %p61 = scmp.ne.s32.totalorder %s53, %s56
      %p62 = scmp.eq.s32.totalorder %s17, 0
      %p63 = por %p61, %p62
      %p64 = scmp.ne.s32.totalorder %s53, %s56
      %p65 = scmp.eq.s32.totalorder %s22, 1
      %p66 = por %p64, %p65
      %p67 = scmp.ne.s32.totalorder %s56, %s57
      %p68 = scmp.eq.s32.totalorder %s22, 0
      %p69 = por %p67, %p68
      %p70 = scmp.ne.s32.totalorder %s56, %s57
      %p71 = scmp.eq.s32.totalorder %s23, 1
      %p72 = por %p70, %p71
      %p74 = scmp.ne.s32.totalorder %s57, %s73
      %p75 = scmp.eq.s32.totalorder %s23, 0
      %p76 = por %p74, %p75
      %s77 = ssub.s32 %s17, %s24
      %p78 = scmp.eq.s32.totalorder %s77, 0
      %s80 = sadd.s32 %s79, 1
      %s81 = scalar_select %p78, %s79, %s80
      %p84 = pneg %p78
      %p85 = scmp.eq.s32.totalorder %s17, 1
      %p86 = por %p84, %p85
      %p87 = scmp.ne.s32.totalorder %s79, %s82
      %p88 = scmp.eq.s32.totalorder %s17, 0
      %p89 = por %p87, %p88
      %p90 = scmp.ne.s32.totalorder %s79, %s82
      %p91 = scmp.eq.s32.totalorder %s22, 1
      %p92 = por %p90, %p91
      %p93 = scmp.ne.s32.totalorder %s82, %s83
      %p94 = scmp.eq.s32.totalorder %s22, 0
      %p95 = por %p93, %p94
      %p96 = scmp.ne.s32.totalorder %s82, %s83
      %p97 = scmp.eq.s32.totalorder %s23, 1
      %p98 = por %p96, %p97
      %p100 = scmp.ne.s32.totalorder %s83, %s99
      %p101 = scmp.eq.s32.totalorder %s23, 0
      %p102 = por %p100, %p101
      %p103 = scmp.le.s32.totalorder 1, %s17
      %p104 = scmp.lt.s32.totalorder %s17, 3
      %p105 = pnand %p103, %p104
      %p106 = pneg %p105
      // Predicated region
      $region9: #{tpu_custom_call.1} parent=5 // pred_check
        _
      $region10: #{tpu_custom_call.1} parent=5 // pred_check_branch
        %108 = sbr.rel (%p105) target = $region12
      $region11: #{tpu_custom_call.1} parent=5 // pred_region
        %s109 = ssub.s32 %s17, 1
      $region12: #{tpu_custom_call.1} parent=5 // pred_fallthru
        _
      %p110 = scmp.lt.s32.totalorder %s17, 2
      // Predicated region
      $region13: #{tpu_custom_call.1} parent=5 // pred_check
        %p111 = pneg %p110
      $region14: #{tpu_custom_call.1} parent=5 // pred_check_branch
        %113 = sbr.rel (%p111) target = $region16
      $region15: #{tpu_custom_call.1} parent=5 // pred_region
        // Predicated region
        $region17: #{tpu_custom_call.1} parent=15 // pred_check
          %p114 = pneg %p37
        $region18: #{tpu_custom_call.1} parent=15 // pred_check_branch
          %116 = sbr.rel (%p114) target = $region20
        $region19: #{tpu_custom_call.1} parent=15 // pred_region
          %s117 = sand.u32 %s27, 1
          %s118 = scalar_lea.sflag [#allocation3], %s117
          %s119 = sand.u32 %s27, 1
          %s120 = smul.addr %s119, 512
          %s121 = scalar_lea.vmem [#allocation2], %s120
          %s122 = smul.u32 4, %s17
          %s124 = ssub.s32 8192, 8192
          %125 = vsyncadd %s118, %s124
          %s126 = smul.addr %s122, 16
          %s127 = smul.addr %s126, 128
          %s128 = scalar_lea.hbm %s0, %s127
          %s129 = sshll.u32 %s121, 4
          %s130 = int_to_ptr.vmem [resolvable:$true] %s129
          %135 = dma.hbm_to_vmem [thread:$0]  %s128, 8192, %s130, %s118, 2048, 2048, 128
        $region20: #{tpu_custom_call.1} parent=15 // pred_fallthru
          _
        // Predicated region
        $region21: #{tpu_custom_call.1} parent=15 // pred_check
          %p136 = pneg %p63
        $region22: #{tpu_custom_call.1} parent=15 // pred_check_branch
          %138 = sbr.rel (%p136) target = $region24
        $region23: #{tpu_custom_call.1} parent=15 // pred_region
          %s139 = sand.u32 %s53, 1
          %s140 = scalar_lea.sflag [#allocation6], %s139
          %s141 = sand.u32 %s53, 1
          %s142 = smul.addr %s141, 512
          %s143 = scalar_lea.vmem [#allocation5], %s142
          %s144 = smul.u32 4, %s17
          %s146 = ssub.s32 8192, 8192
          %147 = vsyncadd %s140, %s146
          %s148 = smul.addr %s144, 16
          %s149 = smul.addr %s148, 128
          %s150 = scalar_lea.hbm %s1, %s149
          %s151 = sshll.u32 %s143, 4
          %s152 = int_to_ptr.vmem [resolvable:$true] %s151
          %157 = dma.hbm_to_vmem [thread:$0]  %s150, 8192, %s152, %s140, 2048, 2048, 128
        $region24: #{tpu_custom_call.1} parent=15 // pred_fallthru
          _
      $region16: #{tpu_custom_call.1} parent=5 // pred_fallthru
        _
      %p158 = scmp.le.s32.totalorder 1, %s17
      %p159 = scmp.lt.s32.totalorder %s17, 3
      %p160 = pnand %p158, %p159
      %p161 = pneg %p160
      // Predicated region
      $region25: #{tpu_custom_call.1} parent=5 // pred_check
        _
      $region26: #{tpu_custom_call.1} parent=5 // pred_check_branch
        %163 = sbr.rel (%p160) target = $region28
      $region27: #{tpu_custom_call.1} parent=5 // pred_region
        %s164 = ssub.s32 %s17, 1
        %s165 = sand.u32 %s30, 1
        %s166 = scalar_lea.sflag [#allocation3], %s165
        %s167 = sand.u32 %s30, 1
        %s168 = smul.addr %s167, 512
        %s169 = scalar_lea.vmem [#allocation2], %s168
        // Predicated region
        $region29: #{tpu_custom_call.1} parent=27 // pred_check
          %p170 = pneg %p43
        $region30: #{tpu_custom_call.1} parent=27 // pred_check_branch
          %172 = sbr.rel (%p170) target = $region32
        $region31: #{tpu_custom_call.1} parent=27 // pred_region
          %173 = dma.done %s166, 8192
        $region32: #{tpu_custom_call.1} parent=27 // pred_fallthru
          _
        %s174 = sand.u32 %s56, 1
        %s175 = scalar_lea.sflag [#allocation6], %s174
        %s176 = sand.u32 %s56, 1
        %s177 = smul.addr %s176, 512
        %s178 = scalar_lea.vmem [#allocation5], %s177
        // Predicated region
        $region33: #{tpu_custom_call.1} parent=27 // pred_check
          %p179 = pneg %p69
        $region34: #{tpu_custom_call.1} parent=27 // pred_check_branch
          %181 = sbr.rel (%p179) target = $region36
        $region35: #{tpu_custom_call.1} parent=27 // pred_region
          %182 = dma.done %s175, 8192
        $region36: #{tpu_custom_call.1} parent=27 // pred_fallthru
          _
        %s183 = sand.u32 %s30, 1
        %s184 = scalar_lea.sflag [#allocation3], %s183
        %s185 = sand.u32 %s30, 1
        %s186 = smul.addr %s185, 512
        %s187 = scalar_lea.vmem [#allocation2], %s186
        %p188 = pneg %p43
        %p189 = pneg %p40
        %s190 = sand.u32 %s56, 1
        %s191 = scalar_lea.sflag [#allocation6], %s190
        %s192 = sand.u32 %s56, 1
        %s193 = smul.addr %s192, 512
        %s194 = scalar_lea.vmem [#allocation5], %s193
        %p195 = pneg %p69
        %p196 = pneg %p66
        %p197 = pneg %p95
        %p198 = pneg %p92
        %s199 = sand.u32 %s82, 1
        %s200 = scalar_lea.sflag [#allocation4], %s199
        %s201 = sand.u32 %s82, 1
        %s202 = smul.addr %s201, 512
        %s203 = scalar_lea.vmem [#allocation7], %s202
        %s204 = smul.u32 4, %s22
        %s205 = smul.u32 4, %s22
        %s206 = smul.u32 4, %s22
        %v207 = vld [vmem:[%s169] sm:$0xff]
        %v208 = vld [vmem:[%s169 + $0x8] sm:$0xff]
        %v209 = vld [vmem:[%s169 + $0x10] sm:$0xff]
        %v210 = vld [vmem:[%s169 + $0x18] sm:$0xff]
        %v211 = vld [vmem:[%s169 + $0x20] sm:$0xff]
        %v212 = vld [vmem:[%s169 + $0x28] sm:$0xff]
        %v213 = vld [vmem:[%s169 + $0x30] sm:$0xff]
        %v214 = vld [vmem:[%s169 + $0x38] sm:$0xff]
        %v215 = vld [vmem:[%s169 + $0x40] sm:$0xff]
        %v216 = vld [vmem:[%s169 + $0x48] sm:$0xff]
        %v217 = vld [vmem:[%s169 + $0x50] sm:$0xff]
        %v218 = vld [vmem:[%s169 + $0x58] sm:$0xff]
        %v219 = vld [vmem:[%s169 + $0x60] sm:$0xff]
        %v220 = vld [vmem:[%s169 + $0x68] sm:$0xff]
        %v221 = vld [vmem:[%s169 + $0x70] sm:$0xff]
        %v222 = vld [vmem:[%s169 + $0x78] sm:$0xff]
        %v223 = vld [vmem:[%s169 + $0x80] sm:$0xff]
        %v224 = vld [vmem:[%s169 + $0x88] sm:$0xff]
        %v225 = vld [vmem:[%s169 + $0x90] sm:$0xff]
        %v226 = vld [vmem:[%s169 + $0x98] sm:$0xff]
        %v227 = vld [vmem:[%s169 + $0xa0] sm:$0xff]
        %v228 = vld [vmem:[%s169 + $0xa8] sm:$0xff]
        %v229 = vld [vmem:[%s169 + $0xb0] sm:$0xff]
        %v230 = vld [vmem:[%s169 + $0xb8] sm:$0xff]
        %v231 = vld [vmem:[%s169 + $0xc0] sm:$0xff]
        %v232 = vld [vmem:[%s169 + $0xc8] sm:$0xff]
        %v233 = vld [vmem:[%s169 + $0xd0] sm:$0xff]
        %v234 = vld [vmem:[%s169 + $0xd8] sm:$0xff]
        %v235 = vld [vmem:[%s169 + $0xe0] sm:$0xff]
        %v236 = vld [vmem:[%s169 + $0xe8] sm:$0xff]
        %v237 = vld [vmem:[%s169 + $0xf0] sm:$0xff]
        %v238 = vld [vmem:[%s169 + $0xf8] sm:$0xff]
        %v239 = vld [vmem:[%s169 + $0x100] sm:$0xff]
        %v240 = vld [vmem:[%s169 + $0x108] sm:$0xff]
        %v241 = vld [vmem:[%s169 + $0x110] sm:$0xff]
        %v242 = vld [vmem:[%s169 + $0x118] sm:$0xff]
        %v243 = vld [vmem:[%s169 + $0x120] sm:$0xff]
        %v244 = vld [vmem:[%s169 + $0x128] sm:$0xff]
        %v245 = vld [vmem:[%s169 + $0x130] sm:$0xff]
        %v246 = vld [vmem:[%s169 + $0x138] sm:$0xff]
        %v247 = vld [vmem:[%s169 + $0x140] sm:$0xff]
        %v248 = vld [vmem:[%s169 + $0x148] sm:$0xff]
        %v249 = vld [vmem:[%s169 + $0x150] sm:$0xff]
        %v250 = vld [vmem:[%s169 + $0x158] sm:$0xff]
        %v251 = vld [vmem:[%s169 + $0x160] sm:$0xff]
        %v252 = vld [vmem:[%s169 + $0x168] sm:$0xff]
        %v253 = vld [vmem:[%s169 + $0x170] sm:$0xff]
        %v254 = vld [vmem:[%s169 + $0x178] sm:$0xff]
        %v255 = vld [vmem:[%s169 + $0x180] sm:$0xff]
        %v256 = vld [vmem:[%s169 + $0x188] sm:$0xff]
        %v257 = vld [vmem:[%s169 + $0x190] sm:$0xff]
        %v258 = vld [vmem:[%s169 + $0x198] sm:$0xff]
        %v259 = vld [vmem:[%s169 + $0x1a0] sm:$0xff]
        %v260 = vld [vmem:[%s169 + $0x1a8] sm:$0xff]
        %v261 = vld [vmem:[%s169 + $0x1b0] sm:$0xff]
        %v262 = vld [vmem:[%s169 + $0x1b8] sm:$0xff]
        %v263 = vld [vmem:[%s169 + $0x1c0] sm:$0xff]
        %v264 = vld [vmem:[%s169 + $0x1c8] sm:$0xff]
        %v265 = vld [vmem:[%s169 + $0x1d0] sm:$0xff]
        %v266 = vld [vmem:[%s169 + $0x1d8] sm:$0xff]
        %v267 = vld [vmem:[%s169 + $0x1e0] sm:$0xff]
        %v268 = vld [vmem:[%s169 + $0x1e8] sm:$0xff]
        %v269 = vld [vmem:[%s169 + $0x1f0] sm:$0xff]
        %v270 = vld [vmem:[%s169 + $0x1f8] sm:$0xff]
        %v271 = vld [vmem:[%s178] sm:$0xff]
        %v272 = vld [vmem:[%s178 + $0x8] sm:$0xff]
        %v273 = vld [vmem:[%s178 + $0x10] sm:$0xff]
        %v274 = vld [vmem:[%s178 + $0x18] sm:$0xff]
        %v275 = vld [vmem:[%s178 + $0x20] sm:$0xff]
        %v276 = vld [vmem:[%s178 + $0x28] sm:$0xff]
        %v277 = vld [vmem:[%s178 + $0x30] sm:$0xff]
        %v278 = vld [vmem:[%s178 + $0x38] sm:$0xff]
        %v279 = vld [vmem:[%s178 + $0x40] sm:$0xff]
        %v280 = vld [vmem:[%s178 + $0x48] sm:$0xff]
        %v281 = vld [vmem:[%s178 + $0x50] sm:$0xff]
        %v282 = vld [vmem:[%s178 + $0x58] sm:$0xff]
        %v283 = vld [vmem:[%s178 + $0x60] sm:$0xff]
        %v284 = vld [vmem:[%s178 + $0x68] sm:$0xff]
        %v285 = vld [vmem:[%s178 + $0x70] sm:$0xff]
        %v286 = vld [vmem:[%s178 + $0x78] sm:$0xff]
        %v287 = vld [vmem:[%s178 + $0x80] sm:$0xff]
        %v288 = vld [vmem:[%s178 + $0x88] sm:$0xff]
        %v289 = vld [vmem:[%s178 + $0x90] sm:$0xff]
        %v290 = vld [vmem:[%s178 + $0x98] sm:$0xff]
        %v291 = vld [vmem:[%s178 + $0xa0] sm:$0xff]
        %v292 = vld [vmem:[%s178 + $0xa8] sm:$0xff]
        %v293 = vld [vmem:[%s178 + $0xb0] sm:$0xff]
        %v294 = vld [vmem:[%s178 + $0xb8] sm:$0xff]
        %v295 = vld [vmem:[%s178 + $0xc0] sm:$0xff]
        %v296 = vld [vmem:[%s178 + $0xc8] sm:$0xff]
        %v297 = vld [vmem:[%s178 + $0xd0] sm:$0xff]
        %v298 = vld [vmem:[%s178 + $0xd8] sm:$0xff]
        %v299 = vld [vmem:[%s178 + $0xe0] sm:$0xff]
        %v300 = vld [vmem:[%s178 + $0xe8] sm:$0xff]
        %v301 = vld [vmem:[%s178 + $0xf0] sm:$0xff]
        %v302 = vld [vmem:[%s178 + $0xf8] sm:$0xff]
        %v303 = vld [vmem:[%s178 + $0x100] sm:$0xff]
        %v304 = vld [vmem:[%s178 + $0x108] sm:$0xff]
        %v305 = vld [vmem:[%s178 + $0x110] sm:$0xff]
        %v306 = vld [vmem:[%s178 + $0x118] sm:$0xff]
        %v307 = vld [vmem:[%s178 + $0x120] sm:$0xff]
        %v308 = vld [vmem:[%s178 + $0x128] sm:$0xff]
        %v309 = vld [vmem:[%s178 + $0x130] sm:$0xff]
        %v310 = vld [vmem:[%s178 + $0x138] sm:$0xff]
        %v311 = vld [vmem:[%s178 + $0x140] sm:$0xff]
        %v312 = vld [vmem:[%s178 + $0x148] sm:$0xff]
        %v313 = vld [vmem:[%s178 + $0x150] sm:$0xff]
        %v314 = vld [vmem:[%s178 + $0x158] sm:$0xff]
        %v315 = vld [vmem:[%s178 + $0x160] sm:$0xff]
        %v316 = vld [vmem:[%s178 + $0x168] sm:$0xff]
        %v317 = vld [vmem:[%s178 + $0x170] sm:$0xff]
        %v318 = vld [vmem:[%s178 + $0x178] sm:$0xff]
        %v319 = vld [vmem:[%s178 + $0x180] sm:$0xff]
        %v320 = vld [vmem:[%s178 + $0x188] sm:$0xff]
        %v321 = vld [vmem:[%s178 + $0x190] sm:$0xff]
        %v322 = vld [vmem:[%s178 + $0x198] sm:$0xff]
        %v323 = vld [vmem:[%s178 + $0x1a0] sm:$0xff]
        %v324 = vld [vmem:[%s178 + $0x1a8] sm:$0xff]
        %v325 = vld [vmem:[%s178 + $0x1b0] sm:$0xff]
        %v326 = vld [vmem:[%s178 + $0x1b8] sm:$0xff]
        %v327 = vld [vmem:[%s178 + $0x1c0] sm:$0xff]
        %v328 = vld [vmem:[%s178 + $0x1c8] sm:$0xff]
        %v329 = vld [vmem:[%s178 + $0x1d0] sm:$0xff]
        %v330 = vld [vmem:[%s178 + $0x1d8] sm:$0xff]
        %v331 = vld [vmem:[%s178 + $0x1e0] sm:$0xff]
        %v332 = vld [vmem:[%s178 + $0x1e8] sm:$0xff]
        %v333 = vld [vmem:[%s178 + $0x1f0] sm:$0xff]
        %v334 = vld [vmem:[%s178 + $0x1f8] sm:$0xff]
        %v335 = vsub.f32 %v207, %v271
        %v336 = vsub.f32 %v208, %v272
        %v337 = vsub.f32 %v209, %v273
        %v338 = vsub.f32 %v210, %v274
        %v339 = vsub.f32 %v211, %v275
        %v340 = vsub.f32 %v212, %v276
        %v341 = vsub.f32 %v213, %v277
        %v342 = vsub.f32 %v214, %v278
        %v343 = vsub.f32 %v215, %v279
        %v344 = vsub.f32 %v216, %v280
        %v345 = vsub.f32 %v217, %v281
        %v346 = vsub.f32 %v218, %v282
        %v347 = vsub.f32 %v219, %v283
        %v348 = vsub.f32 %v220, %v284
        %v349 = vsub.f32 %v221, %v285
        %v350 = vsub.f32 %v222, %v286
        %v351 = vsub.f32 %v223, %v287
        %v352 = vsub.f32 %v224, %v288
        %v353 = vsub.f32 %v225, %v289
        %v354 = vsub.f32 %v226, %v290
        %v355 = vsub.f32 %v227, %v291
        %v356 = vsub.f32 %v228, %v292
        %v357 = vsub.f32 %v229, %v293
        %v358 = vsub.f32 %v230, %v294
        %v359 = vsub.f32 %v231, %v295
        %v360 = vsub.f32 %v232, %v296
        %v361 = vsub.f32 %v233, %v297
        %v362 = vsub.f32 %v234, %v298
        %v363 = vsub.f32 %v235, %v299
        %v364 = vsub.f32 %v236, %v300
        %v365 = vsub.f32 %v237, %v301
        %v366 = vsub.f32 %v238, %v302
        %v367 = vsub.f32 %v239, %v303
        %v368 = vsub.f32 %v240, %v304
        %v369 = vsub.f32 %v241, %v305
        %v370 = vsub.f32 %v242, %v306
        %v371 = vsub.f32 %v243, %v307
        %v372 = vsub.f32 %v244, %v308
        %v373 = vsub.f32 %v245, %v309
        %v374 = vsub.f32 %v246, %v310
        %v375 = vsub.f32 %v247, %v311
        %v376 = vsub.f32 %v248, %v312
        %v377 = vsub.f32 %v249, %v313
        %v378 = vsub.f32 %v250, %v314
        %v379 = vsub.f32 %v251, %v315
        %v380 = vsub.f32 %v252, %v316
        %v381 = vsub.f32 %v253, %v317
        %v382 = vsub.f32 %v254, %v318
        %v383 = vsub.f32 %v255, %v319
        %v384 = vsub.f32 %v256, %v320
        %v385 = vsub.f32 %v257, %v321
        %v386 = vsub.f32 %v258, %v322
        %v387 = vsub.f32 %v259, %v323
        %v388 = vsub.f32 %v260, %v324
        %v389 = vsub.f32 %v261, %v325
        %v390 = vsub.f32 %v262, %v326
        %v391 = vsub.f32 %v263, %v327
        %v392 = vsub.f32 %v264, %v328
        %v393 = vsub.f32 %v265, %v329
        %v394 = vsub.f32 %v266, %v330
        %v395 = vsub.f32 %v267, %v331
        %v396 = vsub.f32 %v268, %v332
        %v397 = vsub.f32 %v269, %v333
        %v398 = vsub.f32 %v270, %v334
        %v399 = vand.u32 2147483647, %v335
        %v400 = vand.u32 2147483647, %v336
        %v401 = vand.u32 2147483647, %v337
        %v402 = vand.u32 2147483647, %v338
        %v403 = vand.u32 2147483647, %v339
        %v404 = vand.u32 2147483647, %v340
        %v405 = vand.u32 2147483647, %v341
        %v406 = vand.u32 2147483647, %v342
        %v407 = vand.u32 2147483647, %v343
        %v408 = vand.u32 2147483647, %v344
        %v409 = vand.u32 2147483647, %v345
        %v410 = vand.u32 2147483647, %v346
        %v411 = vand.u32 2147483647, %v347
        %v412 = vand.u32 2147483647, %v348
        %v413 = vand.u32 2147483647, %v349
        %v414 = vand.u32 2147483647, %v350
        %v415 = vand.u32 2147483647, %v351
        %v416 = vand.u32 2147483647, %v352
        %v417 = vand.u32 2147483647, %v353
        %v418 = vand.u32 2147483647, %v354
        %v419 = vand.u32 2147483647, %v355
        %v420 = vand.u32 2147483647, %v356
        %v421 = vand.u32 2147483647, %v357
        %v422 = vand.u32 2147483647, %v358
        %v423 = vand.u32 2147483647, %v359
        %v424 = vand.u32 2147483647, %v360
        %v425 = vand.u32 2147483647, %v361
        %v426 = vand.u32 2147483647, %v362
        %v427 = vand.u32 2147483647, %v363
        %v428 = vand.u32 2147483647, %v364
        %v429 = vand.u32 2147483647, %v365
        %v430 = vand.u32 2147483647, %v366
        %v431 = vand.u32 2147483647, %v367
        %v432 = vand.u32 2147483647, %v368
        %v433 = vand.u32 2147483647, %v369
        %v434 = vand.u32 2147483647, %v370
        %v435 = vand.u32 2147483647, %v371
        %v436 = vand.u32 2147483647, %v372
        %v437 = vand.u32 2147483647, %v373
        %v438 = vand.u32 2147483647, %v374
        %v439 = vand.u32 2147483647, %v375
        %v440 = vand.u32 2147483647, %v376
        %v441 = vand.u32 2147483647, %v377
        %v442 = vand.u32 2147483647, %v378
        %v443 = vand.u32 2147483647, %v379
        %v444 = vand.u32 2147483647, %v380
        %v445 = vand.u32 2147483647, %v381
        %v446 = vand.u32 2147483647, %v382
        %v447 = vand.u32 2147483647, %v383
        %v448 = vand.u32 2147483647, %v384
        %v449 = vand.u32 2147483647, %v385
        %v450 = vand.u32 2147483647, %v386
        %v451 = vand.u32 2147483647, %v387
        %v452 = vand.u32 2147483647, %v388
        %v453 = vand.u32 2147483647, %v389
        %v454 = vand.u32 2147483647, %v390
        %v455 = vand.u32 2147483647, %v391
        %v456 = vand.u32 2147483647, %v392
        %v457 = vand.u32 2147483647, %v393
        %v458 = vand.u32 2147483647, %v394
        %v459 = vand.u32 2147483647, %v395
        %v460 = vand.u32 2147483647, %v396
        %v461 = vand.u32 2147483647, %v397
        %v462 = vand.u32 2147483647, %v398
        %463 = vst [vmem:[%s203] sm:$0xff] %v399
        %464 = vst [vmem:[%s203 + $0x8] sm:$0xff] %v400
        %465 = vst [vmem:[%s203 + $0x10] sm:$0xff] %v401
        %466 = vst [vmem:[%s203 + $0x18] sm:$0xff] %v402
        %467 = vst [vmem:[%s203 + $0x20] sm:$0xff] %v403
        %468 = vst [vmem:[%s203 + $0x28] sm:$0xff] %v404
        %469 = vst [vmem:[%s203 + $0x30] sm:$0xff] %v405
        %470 = vst [vmem:[%s203 + $0x38] sm:$0xff] %v406
        %471 = vst [vmem:[%s203 + $0x40] sm:$0xff] %v407
        %472 = vst [vmem:[%s203 + $0x48] sm:$0xff] %v408
        %473 = vst [vmem:[%s203 + $0x50] sm:$0xff] %v409
        %474 = vst [vmem:[%s203 + $0x58] sm:$0xff] %v410
        %475 = vst [vmem:[%s203 + $0x60] sm:$0xff] %v411
        %476 = vst [vmem:[%s203 + $0x68] sm:$0xff] %v412
        %477 = vst [vmem:[%s203 + $0x70] sm:$0xff] %v413
        %478 = vst [vmem:[%s203 + $0x78] sm:$0xff] %v414
        %479 = vst [vmem:[%s203 + $0x80] sm:$0xff] %v415
        %480 = vst [vmem:[%s203 + $0x88] sm:$0xff] %v416
        %481 = vst [vmem:[%s203 + $0x90] sm:$0xff] %v417
        %482 = vst [vmem:[%s203 + $0x98] sm:$0xff] %v418
        %483 = vst [vmem:[%s203 + $0xa0] sm:$0xff] %v419
        %484 = vst [vmem:[%s203 + $0xa8] sm:$0xff] %v420
        %485 = vst [vmem:[%s203 + $0xb0] sm:$0xff] %v421
        %486 = vst [vmem:[%s203 + $0xb8] sm:$0xff] %v422
        %487 = vst [vmem:[%s203 + $0xc0] sm:$0xff] %v423
        %488 = vst [vmem:[%s203 + $0xc8] sm:$0xff] %v424
        %489 = vst [vmem:[%s203 + $0xd0] sm:$0xff] %v425
        %490 = vst [vmem:[%s203 + $0xd8] sm:$0xff] %v426
        %491 = vst [vmem:[%s203 + $0xe0] sm:$0xff] %v427
        %492 = vst [vmem:[%s203 + $0xe8] sm:$0xff] %v428
        %493 = vst [vmem:[%s203 + $0xf0] sm:$0xff] %v429
        %494 = vst [vmem:[%s203 + $0xf8] sm:$0xff] %v430
        %495 = vst [vmem:[%s203 + $0x100] sm:$0xff] %v431
        %496 = vst [vmem:[%s203 + $0x108] sm:$0xff] %v432
        %497 = vst [vmem:[%s203 + $0x110] sm:$0xff] %v433
        %498 = vst [vmem:[%s203 + $0x118] sm:$0xff] %v434
        %499 = vst [vmem:[%s203 + $0x120] sm:$0xff] %v435
        %500 = vst [vmem:[%s203 + $0x128] sm:$0xff] %v436
        %501 = vst [vmem:[%s203 + $0x130] sm:$0xff] %v437
        %502 = vst [vmem:[%s203 + $0x138] sm:$0xff] %v438
        %503 = vst [vmem:[%s203 + $0x140] sm:$0xff] %v439
        %504 = vst [vmem:[%s203 + $0x148] sm:$0xff] %v440
        %505 = vst [vmem:[%s203 + $0x150] sm:$0xff] %v441
        %506 = vst [vmem:[%s203 + $0x158] sm:$0xff] %v442
        %507 = vst [vmem:[%s203 + $0x160] sm:$0xff] %v443
        %508 = vst [vmem:[%s203 + $0x168] sm:$0xff] %v444
        %509 = vst [vmem:[%s203 + $0x170] sm:$0xff] %v445
        %510 = vst [vmem:[%s203 + $0x178] sm:$0xff] %v446
        %511 = vst [vmem:[%s203 + $0x180] sm:$0xff] %v447
        %512 = vst [vmem:[%s203 + $0x188] sm:$0xff] %v448
        %513 = vst [vmem:[%s203 + $0x190] sm:$0xff] %v449
        %514 = vst [vmem:[%s203 + $0x198] sm:$0xff] %v450
        %515 = vst [vmem:[%s203 + $0x1a0] sm:$0xff] %v451
        %516 = vst [vmem:[%s203 + $0x1a8] sm:$0xff] %v452
        %517 = vst [vmem:[%s203 + $0x1b0] sm:$0xff] %v453
        %518 = vst [vmem:[%s203 + $0x1b8] sm:$0xff] %v454
        %519 = vst [vmem:[%s203 + $0x1c0] sm:$0xff] %v455
        %520 = vst [vmem:[%s203 + $0x1c8] sm:$0xff] %v456
        %521 = vst [vmem:[%s203 + $0x1d0] sm:$0xff] %v457
        %522 = vst [vmem:[%s203 + $0x1d8] sm:$0xff] %v458
        %523 = vst [vmem:[%s203 + $0x1e0] sm:$0xff] %v459
        %524 = vst [vmem:[%s203 + $0x1e8] sm:$0xff] %v460
        %525 = vst [vmem:[%s203 + $0x1f0] sm:$0xff] %v461
        %526 = vst [vmem:[%s203 + $0x1f8] sm:$0xff] %v462
        %s527 = sand.u32 %s82, 1
        %s528 = scalar_lea.sflag [#allocation4], %s527
        %s529 = sand.u32 %s82, 1
        %s530 = smul.addr %s529, 512
        %s531 = scalar_lea.vmem [#allocation7], %s530
        // Predicated region
        $region37: #{tpu_custom_call.1} parent=27 // pred_check
          %p532 = pneg %p92
        $region38: #{tpu_custom_call.1} parent=27 // pred_check_branch
          %534 = sbr.rel (%p532) target = $region40
        $region39: #{tpu_custom_call.1} parent=27 // pred_region
          %s535 = smul.u32 4, %s22
          %s537 = ssub.s32 8192, 8192
          %538 = vsyncadd %s528, %s537
          %s539 = smul.addr %s535, 16
          %s540 = smul.addr %s539, 128
          %s541 = scalar_lea.hbm %s2, %s540
          %s542 = sshll.u32 %s531, 4
          %s543 = int_to_ptr.vmem [resolvable:$true] %s542
          %548 = dma.vmem_to_hbm [thread:$0]  %s543, 8192, %s541, %s528, 2048, 2048, 128
        $region40: #{tpu_custom_call.1} parent=27 // pred_fallthru
          _
      $region28: #{tpu_custom_call.1} parent=5 // pred_fallthru
        _
      %p549 = scmp.le.s32.totalorder 2, %s17
      // Predicated region
      $region41: #{tpu_custom_call.1} parent=5 // pred_check
        %p550 = pneg %p549
      $region42: #{tpu_custom_call.1} parent=5 // pred_check_branch
        %552 = sbr.rel (%p550) target = $region44
      $region43: #{tpu_custom_call.1} parent=5 // pred_region
        %s553 = ssub.s32 %s17, 2
        // Predicated region
        $region45: #{tpu_custom_call.1} parent=43 // pred_check
          %p554 = pneg %p98
        $region46: #{tpu_custom_call.1} parent=43 // pred_check_branch
          %556 = sbr.rel (%p554) target = $region48
        $region47: #{tpu_custom_call.1} parent=43 // pred_region
          %s557 = sand.u32 %s83, 1
          %s558 = scalar_lea.sflag [#allocation4], %s557
          %s559 = sand.u32 %s83, 1
          %s560 = smul.addr %s559, 512
          %s561 = scalar_lea.vmem [#allocation7], %s560
          %562 = dma.done %s558, 8192
        $region48: #{tpu_custom_call.1} parent=43 // pred_fallthru
          _
      $region44: #{tpu_custom_call.1} parent=5 // pred_fallthru
        _
    $region6: #{tpu_custom_call.1} parent=1 // loop_footer
      %s21 = sadd.s32 1, %s17
    $region7: #{tpu_custom_call.1} parent=1 // loop_footer_branch
      %16 = sbr.rel target = $region3
    $region8: #{tpu_custom_call.1} parent=1 // loop_exit
      _
    %563 = vsyncpa [#allocation3], 1
    %s564 = scalar_lea.sflag [#allocation3], 1
    %565 = vsyncpa %s564, 1
    %566 = vsyncpa [#allocation6], 1
    %s567 = scalar_lea.sflag [#allocation6], 1
    %568 = vsyncpa %s567, 1
    %569 = vsyncpa [#allocation4], 1
    %s570 = scalar_lea.sflag [#allocation4], 1
    %571 = vsyncpa %s570, 1

</llo_original>
